<compile_context>
chip_gen: v6e
topology: v6e:2x2x1
jax: 0.10.0
libtpu: 0.0.40
codegen_flags: <defaults>
</compile_context>

<pallas_src>
import jax
import jax.numpy as jnp
from jax.experimental import pallas as pl
from jax.experimental.pallas import tpu as pltpu


def _round_up(x: int, m: int) -> int:
    return ((x + m - 1) // m) * m


def _inner_product_kernel(trg_ref, src_ref, out_ref):
    # trg_ref: (TB, N, D), src_ref: (TB, 1, D), out_ref: (TB, N)
    # Multiply in the native input dtype (VPU), accumulate the D reduction in
    # float32 (XLU cross-lane sum) to match torch.matmul semantics.
    prod = trg_ref[...] * src_ref[...]                       # (TB, N, D)
    sims = jnp.sum(prod, axis=-1, dtype=jnp.float32)         # (TB, N), f32 accum
    out_ref[...] = sims.astype(out_ref.dtype)


def inner_product(trg_embds, src_embds, *,
                  vmem_block_budget_bytes: int = 24 * 1024 * 1024,
                  vmem_limit_bytes: int = 48 * 1024 * 1024):
    """Pallas equivalent of InnerProduct()(trg_embds, src_embds) with defaults."""
    B, N, D = trg_embds.shape
    assert src_embds.shape == (B, D)
    out_dtype = jnp.float32

    # ---- choose the batch tile (TB) from a VMEM budget ----------------------
    # Per-batch VMEM footprint of one set of blocks, including (8,128) tile
    # padding; x2 because the pipelined blocks are double-buffered.
    isz = max(jnp.dtype(trg_embds.dtype).itemsize,
              jnp.dtype(src_embds.dtype).itemsize)
    per_batch = (_round_up(N, 8) * _round_up(D, 128) * isz      # trg block
                 + _round_up(D, 128) * isz                      # src block
                 + _round_up(N, 128) * 4)                       # out block (f32)
    budget_tb = max(1, vmem_block_budget_bytes // (2 * per_batch))
    num_tiles = pl.cdiv(B, budget_tb)
    if num_tiles == 1:
        tb = B                                    # single full-extent block
    else:
        # out block is (tb, N): second-to-last dim must be a multiple of 8
        # when it is not the full array extent.
        tb = _round_up(pl.cdiv(B, num_tiles), 8)
    b_padded = tb * num_tiles

    trg = trg_embds
    src = src_embds[:, None, :]                   # (B, 1, D) broadcast dim
    if b_padded != B:                             # zero-pad the tail tile
        trg = jnp.pad(trg, ((0, b_padded - B), (0, 0), (0, 0)))
        src = jnp.pad(src, ((0, b_padded - B), (0, 0), (0, 0)))

    sims = pl.pallas_call(
        _inner_product_kernel,
        out_shape=jax.ShapeDtypeStruct((b_padded, N), out_dtype),
        grid=(num_tiles,),
        in_specs=[
            pl.BlockSpec((tb, N, D), lambda i: (i, 0, 0)),
            pl.BlockSpec((tb, 1, D), lambda i: (i, 0, 0)),
        ],
        out_specs=pl.BlockSpec((tb, N), lambda i: (i, 0)),
        compiler_params=pltpu.CompilerParams(
            dimension_semantics=("parallel",),
            vmem_limit_bytes=vmem_limit_bytes,
        ),
        cost_estimate=pl.CostEstimate(
            flops=2 * B * N * D,
            transcendentals=0,
            bytes_accessed=(trg_embds.size * trg_embds.dtype.itemsize
                            + src_embds.size * src_embds.dtype.itemsize
                            + B * N * 4),
        ),
    )(trg, src)
    return sims[:B]


if __name__ == "__main__":
    key = jax.random.PRNGKey(0)
    k_trg, k_src, k_trg2, k_src2 = jax.random.split(key, 4)

    # --- small shapes consistent with the module's forward -------------------
    B, N, D = 2, 8, 32
    trg = jax.random.normal(k_trg, (B, N, D), dtype=jnp.float32)
    src = jax.random.normal(k_src, (B, D), dtype=jnp.float32)

    sims = jax.block_until_ready(inner_product(trg, src))

    ref = jnp.einsum("bnd,bd->bn", trg, src,
                     precision=jax.lax.Precision.HIGHEST)
    assert sims.shape == (B, N)
    assert sims.dtype == jnp.float32
    assert jnp.allclose(sims, ref, atol=1e-4, rtol=1e-4), (
        f"max abs err {jnp.max(jnp.abs(sims - ref))}")

    # --- also exercise the multi-tile grid path (padding + batch tiling) -----
    B2 = 40
    trg2 = jax.random.normal(k_trg2, (B2, N, D), dtype=jnp.float32)
    src2 = jax.random.normal(k_src2, (B2, D), dtype=jnp.float32)
    # Force a tiny block budget so several grid steps (and a padded tail) run.
    sims2 = jax.block_until_ready(
        inner_product(trg2, src2,
                      vmem_block_budget_bytes=8 * (8 * 128 * 4 + 128 * 4 + 128 * 4)))
    ref2 = jnp.einsum("bnd,bd->bn", trg2, src2,
                      precision=jax.lax.Precision.HIGHEST)
    assert sims2.shape == (B2, N)
    assert jnp.allclose(sims2, ref2, atol=1e-4, rtol=1e-4), (
        f"max abs err {jnp.max(jnp.abs(sims2 - ref2))}")

    print("KERNEL_OK")
</pallas_src>

<mosaic_0001>
module attributes {stable_mosaic.version = 11 : i64} {
  func.func @_inner_product_kernel(%arg0: i32, %arg1: memref<2x8x32xf32, #tpu.memory_space<vmem>>, %arg2: memref<2x1x32xf32, #tpu.memory_space<vmem>>, %arg3: memref<2x8xf32, #tpu.memory_space<vmem>>) attributes {dimension_semantics = [#tpu.dimension_semantics<parallel>], iteration_bounds = array<i64: 1>, scalar_prefetch = 0 : i64, scratch_operands = 0 : i64, tpu.core_type = #tpu.core_type<tc>, window_params = [{transform_indices = @transform_0, window_bounds = array<i64: 2, 8, 32>}, {transform_indices = @transform_1, window_bounds = array<i64: 2, 1, 32>}, {transform_indices = @transform_2, window_bounds = array<i64: 2, 8>}]} {
    %c0 = arith.constant 0 : index
    %c0_0 = arith.constant 0 : index
    %c0_1 = arith.constant 0 : index
    %0 = vector.load %arg1[%c0, %c0_0, %c0_1] : memref<2x8x32xf32, #tpu.memory_space<vmem>>, vector<2x8x32xf32>
    %c0_2 = arith.constant 0 : index
    %c0_3 = arith.constant 0 : index
    %c0_4 = arith.constant 0 : index
    %1 = vector.load %arg2[%c0_2, %c0_3, %c0_4] : memref<2x1x32xf32, #tpu.memory_space<vmem>>, vector<2x1x32xf32>
    %2 = vector.broadcast %1 : vector<2x1x32xf32> to vector<2x8x32xf32>
    %3 = arith.mulf %0, %2 : vector<2x8x32xf32>
    %cst = arith.constant dense<0.000000e+00> : vector<2x8xf32>
    %4 = vector.multi_reduction <add>, %3, %cst [2] : vector<2x8x32xf32> to vector<2x8xf32>
    %c0_5 = arith.constant 0 : index
    %c0_6 = arith.constant 0 : index
    %5 = vector.load %arg3[%c0_5, %c0_6] : memref<2x8xf32, #tpu.memory_space<vmem>>, vector<2x8xf32>
    tpu.vector_store %arg3[%c0_5, %c0_6], %4 {strides = array<i32>} : memref<2x8xf32, #tpu.memory_space<vmem>>, vector<2x8xf32>,
    return
  }
  func.func @transform_0(%arg0: i32) -> (i32, i32, i32) {
    %c0_i32 = arith.constant 0 : i32
    %c0_i32_0 = arith.constant 0 : i32
    %c0_i32_1 = arith.constant 0 : i32
    return %arg0, %c0_i32, %c0_i32_0 : i32, i32, i32
  }
  func.func @transform_1(%arg0: i32) -> (i32, i32, i32) {
    %c0_i32 = arith.constant 0 : i32
    %c0_i32_0 = arith.constant 0 : i32
    %c0_i32_1 = arith.constant 0 : i32
    return %arg0, %c0_i32, %c0_i32_0 : i32, i32, i32
  }
  func.func @transform_2(%arg0: i32) -> (i32, i32) {
    %c0_i32 = arith.constant 0 : i32
    %c0_i32_0 = arith.constant 0 : i32
    return %arg0, %c0_i32 : i32, i32
  }
}

</mosaic_0001>

<llo_original>
// kernel: tpu_custom_call.1
$region0: #{tpu_custom_call.1}
  #allocation0 [shape = 'u32[]', space=smem, size = 0x4, offset = 0x4, fixed_abs, tag = 'smem constant byte address 0x4 - core index']
  #allocation1 [shape = 'u32[144,128]{1,0:T(1,128)}', space=vmem, size = 0x12000, scoped, tag = 'internal scratch']
  %s0 = inlined_call_operand.hbm [shape: f32[2,8,32], index: 0, kind: input, shape index: {}]
  %s1 = inlined_call_operand.hbm [shape: f32[2,1,32], index: 1, kind: input, shape index: {}]
  %s2 = inlined_call_operand.hbm [shape: f32[2,8], index: 2, kind: output, shape index: {}]
  %s3 = sld [smem:[#allocation0]]
  $region26: #{tpu_custom_call.1} parent=0
    _
  %s5 = ssub.s32 1, %s3
  %s6 = scalar_select 0, %s5, %s3
  $region1: #{tpu_custom_call.1} parent=0
    #allocation2 [shape = 'u8[8192]{0}', space=vmem, size = 0x2000, scoped, tag = 'input window, operand 0, single buffered']
    #allocation3 [shape = 's32[1]{0}', space=sflag, size = 0x4, scoped, tag = 'scoped memory for tpu_custom_call.1']
    #allocation4 [shape = 's32[1]{0}', space=sflag, size = 0x4, scoped, tag = 'scoped memory for tpu_custom_call.1']
    #allocation5 [shape = 'u8[1024]{0}', space=vmem, size = 0x400, scoped, tag = 'input window, operand 1, single buffered']
    #allocation6 [shape = 's32[1]{0}', space=sflag, size = 0x4, scoped, tag = 'scoped memory for tpu_custom_call.1']
    #allocation7 [shape = 'u8[1024]{0}', space=vmem, size = 0x400, scoped, tag = 'output window, operand 0, single buffered']
    %7 = vsyncpa [#allocation3], 0
    %8 = vsyncpa [#allocation6], 0
    %9 = vsyncpa [#allocation4], 0
    // Predicated region
    $region2: #{tpu_custom_call.1} parent=1 // pred_check
      _
    $region3: #{tpu_custom_call.1} parent=1 // pred_check_branch
      %11 = sbr.rel (0) target = $region5
    $region4: #{tpu_custom_call.1} parent=1 // pred_region
      %s13 = ssub.s32 256, 256
      %14 = vsyncadd [#allocation3], %s13
      %s15 = sshll.u32 [#allocation2], 4
      %s16 = int_to_ptr.vmem [resolvable:$true] %s15
      %21 = dma.hbm_to_vmem [thread:$0]  %s0, 256, %s16, [#allocation3], 128, 128, 8
    $region5: #{tpu_custom_call.1} parent=1 // pred_fallthru
      _
    // Predicated region
    $region6: #{tpu_custom_call.1} parent=1 // pred_check
      _
    $region7: #{tpu_custom_call.1} parent=1 // pred_check_branch
      %23 = sbr.rel (0) target = $region9
    $region8: #{tpu_custom_call.1} parent=1 // pred_region
      %s25 = ssub.s32 32, 32
      %26 = vsyncadd [#allocation6], %s25
      %s27 = sshll.u32 [#allocation5], 4
      %s28 = int_to_ptr.vmem [resolvable:$true] %s27
      %33 = dma.hbm_to_vmem [thread:$0]  %s1, 32, %s28, [#allocation6], 16, 16, 1
    $region9: #{tpu_custom_call.1} parent=1 // pred_fallthru
      _
    // Predicated region
    $region10: #{tpu_custom_call.1} parent=1 // pred_check
      _
    $region11: #{tpu_custom_call.1} parent=1 // pred_check_branch
      %35 = sbr.rel (0) target = $region13
    $region12: #{tpu_custom_call.1} parent=1 // pred_region
      %36 = dma.done [#allocation3], 256
    $region13: #{tpu_custom_call.1} parent=1 // pred_fallthru
      _
    // Predicated region
    $region14: #{tpu_custom_call.1} parent=1 // pred_check
      _
    $region15: #{tpu_custom_call.1} parent=1 // pred_check_branch
      %38 = sbr.rel (0) target = $region17
    $region16: #{tpu_custom_call.1} parent=1 // pred_region
      %39 = dma.done [#allocation6], 32
    $region17: #{tpu_custom_call.1} parent=1 // pred_fallthru
      _
    %v40 = vld [vmem:[#allocation2] sm:$0xff]
    %v41 = vld [vmem:[#allocation2 + $0x8] sm:$0xff]
    %v42 = vld [vmem:[#allocation5] sm:$0x1]
    %v43 = vld [vmem:[#allocation5 + $0x1] sm:$0x1]
    %v46 = vlaneseq
    %v47 = vshrl.u32 %v46, 7
    %v48 = vsub.s32 0, %v47
    %v49 = vrot.slane %v42, %v48
    %v50 = vlaneseq
    %v51 = vshrl.u32 %v50, 7
    %v52 = vsub.s32 0, %v51
    %v53 = vrot.slane %v43, %v52
    %v56 = vmul.f32 %v40, %v49
    %v57 = vmul.f32 %v41, %v53
    %vm58 = vcmask 261120
    %v59 = vsel %vm58, %v56, 0.0
    %60 = vadd.xlane.f32.xlu0 %v59
    %v61 = vpop.xlane.xlu0 %60
    %v62 = vsel %vm58, %v57, 0.0
    %63 = vadd.xlane.f32.xlu0 %v62
    %v64 = vpop.xlane.xlu0 %63
    %v67 = vlaneseq
    %v68 = vand.u32 %v67, 127
    %v69 = vlaneseq
    %v70 = vshrl.u32 %v69, 7
    %v71 = vsub.s32 %v68, %v70
    %v72 = vrot.slane %v61, %v71
    %v73 = vlaneseq
    %v74 = vshrl.u32 %v73, 7
    %v75 = vsub.s32 %v68, %v74
    %v76 = vrot.slane %v64, %v75
    %vm77 = vcmask 1041409
    %v78 = vsel %vm77, %v76, %v72
    %vm80 = vcmask 58368
    %81 = vst.msk [vmem:[#allocation7] sm:$0x3] %vm80, %v78
    // Predicated region
    $region18: #{tpu_custom_call.1} parent=1 // pred_check
      _
    $region19: #{tpu_custom_call.1} parent=1 // pred_check_branch
      %83 = sbr.rel (0) target = $region21
    $region20: #{tpu_custom_call.1} parent=1 // pred_region
      %s85 = ssub.s32 32, 32
      %86 = vsyncadd [#allocation4], %s85
      %s88 = sshll.u32 [#allocation7], 4
      %s89 = int_to_ptr.vmem [resolvable:$true] %s88
      %91 = dma.vmem_to_hbm [thread:$0]  %s89, 32, %s2, [#allocation4]
    $region21: #{tpu_custom_call.1} parent=1 // pred_fallthru
      _
    // Predicated region
    $region22: #{tpu_custom_call.1} parent=1 // pred_check
      _
    $region23: #{tpu_custom_call.1} parent=1 // pred_check_branch
      %93 = sbr.rel (0) target = $region25
    $region24: #{tpu_custom_call.1} parent=1 // pred_region
      %94 = dma.done [#allocation4], 32
    $region25: #{tpu_custom_call.1} parent=1 // pred_fallthru
      _
    %95 = vsyncpa [#allocation3], 1
    %96 = vsyncpa [#allocation6], 1
    %97 = vsyncpa [#allocation4], 1

</llo_original>
